<compile_context>
chip_gen: v7x
topology: tpu7x:2x2x1
jax: 0.10.0
libtpu: 0.0.40
codegen_flags: <defaults>
</compile_context>

<pallas_src>
import jax
import jax.numpy as jnp
from jax.experimental import pallas as pl
from jax.experimental.pallas import tpu as pltpu

LANE = 128      # TPU lane width (last dim alignment)
SUBLANE = 8     # f32 sublane packing (second-to-last dim alignment)


def _round_up(x, m):
    return ((x + m - 1) // m) * m


def mlp_kernel(x_ref, w1_ref, b1_ref, w2_ref, b2_ref, o_ref):
    # fc1 -> relu (f32 accumulation on the MXU)
    h = jnp.dot(x_ref[...], w1_ref[...], preferred_element_type=jnp.float32)
    h = jnp.maximum(h + b1_ref[...], 0.0)          # b1 is (1, H), broadcasts over rows
    # fc2 -> sigmoid (same dtype in/out, no astype needed)
    y = jnp.dot(h, w2_ref[...], preferred_element_type=jnp.float32)
    y = y + b2_ref[...]                            # b2 is (1, N)
    o_ref[...] = jax.nn.sigmoid(y).astype(o_ref.dtype)


def neural_net_forward(x, w1, b1, w2, b2, *, max_tile_b=256):
    """y = sigmoid(relu(x @ w1 + b1) @ w2 + b2), computed in a single Pallas kernel.

    w1: (input_size, hidden), b1: (1, hidden) or (hidden,)
    w2: (hidden, output),     b2: (1, output) or (output,)
    """
    B, in_size = x.shape
    hidden = w1.shape[1]
    out_size = w2.shape[1]

    # MXU / lane alignment: pad contraction and output dims to multiples of 128,
    # batch to a multiple of 8 (f32 sublanes). Small batches run as ONE grid step;
    # large batches tile at up to `max_tile_b` rows per step.
    K = _round_up(in_size, LANE)
    H = _round_up(hidden, LANE)
    N = _round_up(out_size, LANE)

    B8 = _round_up(B, SUBLANE)
    tile_b = B8 if B8 <= max_tile_b else max_tile_b
    Bp = _round_up(B, tile_b)

    # Zero-pad once in the wrapper (plain XLA ops, outside the kernel).
    xp = jnp.zeros((Bp, K), x.dtype).at[:B, :in_size].set(x)
    w1p = jnp.zeros((K, H), w1.dtype).at[:in_size, :hidden].set(w1)
    b1p = jnp.zeros((1, H), b1.dtype).at[:, :hidden].set(jnp.reshape(b1, (1, hidden)))
    w2p = jnp.zeros((H, N), w2.dtype).at[:hidden, :out_size].set(w2)
    b2p = jnp.zeros((1, N), b2.dtype).at[:, :out_size].set(jnp.reshape(b2, (1, out_size)))

    grid = (Bp // tile_b,)
    out_padded = pl.pallas_call(
        mlp_kernel,
        out_shape=jax.ShapeDtypeStruct((Bp, N), jnp.float32),
        grid_spec=pltpu.PrefetchScalarGridSpec(
            num_scalar_prefetch=0,
            grid=grid,
            in_specs=[
                pl.BlockSpec((tile_b, K), lambda i: (i, 0)),   # x tile
                pl.BlockSpec((K, H),      lambda i: (0, 0)),   # W1 (resident)
                pl.BlockSpec((1, H),      lambda i: (0, 0)),   # b1
                pl.BlockSpec((H, N),      lambda i: (0, 0)),   # W2 (resident)
                pl.BlockSpec((1, N),      lambda i: (0, 0)),   # b2
            ],
            out_specs=pl.BlockSpec((tile_b, N), lambda i: (i, 0)),  # lane-dense slab
        ),
        compiler_params=pltpu.CompilerParams(
            dimension_semantics=("parallel",),
            vmem_limit_bytes=64 * 1024 * 1024,
        ),
    )(xp, w1p, b1p, w2p, b2p)

    # Slice away batch / output-lane padding.
    return out_padded[:B, :out_size]


def reference_forward(x, w1, b1, w2, b2):
    h = jnp.maximum(x @ w1 + b1, 0.0)
    return jax.nn.sigmoid(h @ w2 + b2)


if __name__ == "__main__":
    # Small shapes consistent with the module: Linear(input, hidden) -> Linear(hidden, output)
    batch, input_size, hidden_size, output_size = 16, 32, 64, 8

    key = jax.random.PRNGKey(0)
    kx, kw1, kb1, kw2, kb2 = jax.random.split(key, 5)

    x = jax.random.normal(kx, (batch, input_size), dtype=jnp.float32)

    # Deterministic parameter init (mimics PyTorch Linear's uniform(-1/sqrt(fan_in), 1/sqrt(fan_in)))
    lim1 = 1.0 / jnp.sqrt(input_size)
    lim2 = 1.0 / jnp.sqrt(hidden_size)
    w1 = jax.random.uniform(kw1, (input_size, hidden_size), jnp.float32, -lim1, lim1)
    b1 = jax.random.uniform(kb1, (1, hidden_size), jnp.float32, -lim1, lim1)
    w2 = jax.random.uniform(kw2, (hidden_size, output_size), jnp.float32, -lim2, lim2)
    b2 = jax.random.uniform(kb2, (1, output_size), jnp.float32, -lim2, lim2)

    out = neural_net_forward(x, w1, b1, w2, b2)
    out = jax.block_until_ready(out)

    ref = reference_forward(x, w1, b1, w2, b2)
    assert out.shape == (batch, output_size)
    assert jnp.allclose(out, ref, atol=1e-5, rtol=1e-5), "mismatch vs reference"

    print("KERNEL_OK")
</pallas_src>

<mosaic_0001>
module attributes {stable_mosaic.version = 11 : i64} {
  func.func @mlp_kernel(%arg0: i32, %arg1: memref<16x128xf32, #tpu.memory_space<vmem>>, %arg2: memref<128x128xf32, #tpu.memory_space<vmem>>, %arg3: memref<1x128xf32, #tpu.memory_space<vmem>>, %arg4: memref<128x128xf32, #tpu.memory_space<vmem>>, %arg5: memref<1x128xf32, #tpu.memory_space<vmem>>, %arg6: memref<16x128xf32, #tpu.memory_space<vmem>>) attributes {dimension_semantics = [#tpu.dimension_semantics<parallel>], iteration_bounds = array<i64: 1>, scalar_prefetch = 0 : i64, scratch_operands = 0 : i64, tpu.core_type = #tpu.core_type<tc>, window_params = [{transform_indices = @transform_0, window_bounds = array<i64: 16, 128>}, {pipeline_mode = #tpu.pipeline_mode<synchronous>, transform_indices = @transform_1, window_bounds = array<i64: 128, 128>}, {pipeline_mode = #tpu.pipeline_mode<synchronous>, transform_indices = @transform_2, window_bounds = array<i64: 1, 128>}, {pipeline_mode = #tpu.pipeline_mode<synchronous>, transform_indices = @transform_3, window_bounds = array<i64: 128, 128>}, {pipeline_mode = #tpu.pipeline_mode<synchronous>, transform_indices = @transform_4, window_bounds = array<i64: 1, 128>}, {transform_indices = @transform_5, window_bounds = array<i64: 16, 128>}]} {
    %c0 = arith.constant 0 : index
    %c0_0 = arith.constant 0 : index
    %0 = vector.load %arg1[%c0, %c0_0] : memref<16x128xf32, #tpu.memory_space<vmem>>, vector<16x128xf32>
    %c0_1 = arith.constant 0 : index
    %c0_2 = arith.constant 0 : index
    %1 = vector.load %arg2[%c0_1, %c0_2] : memref<128x128xf32, #tpu.memory_space<vmem>>, vector<128x128xf32>
    %cst = arith.constant dense<0.000000e+00> : vector<16x128xf32>
    %2 = tpu.matmul %0, %1, %cst {dimension_numbers = #tpu.dot_dimension_numbers<[1], [0], [0], [1], [0, 0, 1, 1], [], []>} : vector<16x128xf32>, vector<128x128xf32>, vector<16x128xf32> -> vector<16x128xf32>
    %c0_3 = arith.constant 0 : index
    %c0_4 = arith.constant 0 : index
    %3 = vector.load %arg3[%c0_3, %c0_4] : memref<1x128xf32, #tpu.memory_space<vmem>>, vector<1x128xf32>
    %4 = vector.broadcast %3 : vector<1x128xf32> to vector<16x128xf32>
    %5 = arith.addf %2, %4 : vector<16x128xf32>
    %cst_5 = arith.constant 0.000000e+00 : f32
    %6 = vector.broadcast %cst_5 : f32 to vector<16x128xf32>
    %7 = arith.maximumf %5, %6 : vector<16x128xf32>
    %c0_6 = arith.constant 0 : index
    %c0_7 = arith.constant 0 : index
    %8 = vector.load %arg4[%c0_6, %c0_7] : memref<128x128xf32, #tpu.memory_space<vmem>>, vector<128x128xf32>
    %cst_8 = arith.constant dense<0.000000e+00> : vector<16x128xf32>
    %9 = tpu.matmul %7, %8, %cst_8 {dimension_numbers = #tpu.dot_dimension_numbers<[1], [0], [0], [1], [0, 0, 1, 1], [], []>} : vector<16x128xf32>, vector<128x128xf32>, vector<16x128xf32> -> vector<16x128xf32>
    %c0_9 = arith.constant 0 : index
    %c0_10 = arith.constant 0 : index
    %10 = vector.load %arg5[%c0_9, %c0_10] : memref<1x128xf32, #tpu.memory_space<vmem>>, vector<1x128xf32>
    %11 = vector.broadcast %10 : vector<1x128xf32> to vector<16x128xf32>
    %12 = arith.addf %9, %11 : vector<16x128xf32>
    %13 = arith.negf %12 : vector<16x128xf32>
    %14 = math.exp %13 : vector<16x128xf32>
    %cst_11 = arith.constant 1.000000e+00 : f32
    %15 = vector.broadcast %cst_11 : f32 to vector<16x128xf32>
    %16 = arith.addf %15, %14 : vector<16x128xf32>
    %17 = arith.divf %15, %16 : vector<16x128xf32>
    %c0_12 = arith.constant 0 : index
    %c0_13 = arith.constant 0 : index
    %18 = vector.load %arg6[%c0_12, %c0_13] : memref<16x128xf32, #tpu.memory_space<vmem>>, vector<16x128xf32>
    tpu.vector_store %arg6[%c0_12, %c0_13], %17 {strides = array<i32>} : memref<16x128xf32, #tpu.memory_space<vmem>>, vector<16x128xf32>,
    return
  }
  func.func @transform_0(%arg0: i32) -> (i32, i32) {
    %c0_i32 = arith.constant 0 : i32
    %c0_i32_0 = arith.constant 0 : i32
    return %arg0, %c0_i32 : i32, i32
  }
  func.func @transform_1(%arg0: i32) -> (i32, i32) {
    %c0_i32 = arith.constant 0 : i32
    %c0_i32_0 = arith.constant 0 : i32
    %c0_i32_1 = arith.constant 0 : i32
    return %c0_i32, %c0_i32_0 : i32, i32
  }
  func.func @transform_2(%arg0: i32) -> (i32, i32) {
    %c0_i32 = arith.constant 0 : i32
    %c0_i32_0 = arith.constant 0 : i32
    %c0_i32_1 = arith.constant 0 : i32
    return %c0_i32, %c0_i32_0 : i32, i32
  }
  func.func @transform_3(%arg0: i32) -> (i32, i32) {
    %c0_i32 = arith.constant 0 : i32
    %c0_i32_0 = arith.constant 0 : i32
    %c0_i32_1 = arith.constant 0 : i32
    return %c0_i32, %c0_i32_0 : i32, i32
  }
  func.func @transform_4(%arg0: i32) -> (i32, i32) {
    %c0_i32 = arith.constant 0 : i32
    %c0_i32_0 = arith.constant 0 : i32
    %c0_i32_1 = arith.constant 0 : i32
    return %c0_i32, %c0_i32_0 : i32, i32
  }
  func.func @transform_5(%arg0: i32) -> (i32, i32) {
    %c0_i32 = arith.constant 0 : i32
    %c0_i32_0 = arith.constant 0 : i32
    return %arg0, %c0_i32 : i32, i32
  }
}

</mosaic_0001>

<llo_original>
// kernel: tpu_custom_call.1
$region0: #{tpu_custom_call.1}
  #allocation0 [shape = 'u32[]', space=smem, size = 0x4, offset = 0x4, fixed_abs, tag = 'smem constant byte address 0x4 - core index']
  #allocation1 [shape = 'u32[144,128]{1,0:T(1,128)}', space=vmem, size = 0x12000, scoped, tag = 'internal scratch']
  %s0 = inlined_call_operand.hbm [shape: f32[16,128], index: 0, kind: input, shape index: {}]
  %s1 = inlined_call_operand.hbm [shape: f32[128,128], index: 1, kind: input, shape index: {}]
  %s2 = inlined_call_operand.hbm [shape: f32[1,128], index: 2, kind: input, shape index: {}]
  %s3 = inlined_call_operand.hbm [shape: f32[128,128], index: 3, kind: input, shape index: {}]
  %s4 = inlined_call_operand.hbm [shape: f32[1,128], index: 4, kind: input, shape index: {}]
  %s5 = inlined_call_operand.hbm [shape: f32[16,128], index: 5, kind: output, shape index: {}]
  %s6 = sld [smem:[#allocation0]]
  $region50: #{tpu_custom_call.1} parent=0
    _
  %s8 = ssub.s32 1, %s6
  %s9 = scalar_select 0, %s8, %s6
  $region1: #{tpu_custom_call.1} parent=0
    #allocation2 [shape = 'u8[8192]{0}', space=vmem, size = 0x2000, scoped, tag = 'input window, operand 0, single buffered']
    #allocation3 [shape = 's32[1]{0}', space=sflag, size = 0x4, scoped, tag = 'scoped memory for tpu_custom_call.1']
    #allocation4 [shape = 's32[1]{0}', space=sflag, size = 0x4, scoped, tag = 'scoped memory for tpu_custom_call.1']
    #allocation5 [shape = 'u8[65536]{0}', space=vmem, size = 0x10000, scoped, tag = 'input window, operand 1, single buffered']
    #allocation6 [shape = 's32[1]{0}', space=sflag, size = 0x4, scoped, tag = 'scoped memory for tpu_custom_call.1']
    #allocation7 [shape = 'u8[512]{0}', space=vmem, size = 0x400, scoped, tag = 'input window, operand 2, single buffered']
    #allocation8 [shape = 'u8[65536]{0}', space=vmem, size = 0x10000, scoped, tag = 'input window, operand 3, single buffered']
    #allocation9 [shape = 's32[1]{0}', space=sflag, size = 0x4, scoped, tag = 'scoped memory for tpu_custom_call.1']
    #allocation10 [shape = 'u8[512]{0}', space=vmem, size = 0x400, scoped, tag = 'input window, operand 4, single buffered']
    #allocation11 [shape = 'u8[8192]{0}', space=vmem, size = 0x2000, scoped, tag = 'output window, operand 0, single buffered']
    %10 = vsyncpa [#allocation3], 0
    %11 = vsyncpa [#allocation6], 0
    %12 = vsyncpa [#allocation9], 0
    %13 = vsyncpa [#allocation4], 0
    // Predicated region
    $region2: #{tpu_custom_call.1} parent=1 // pred_check
      _
    $region3: #{tpu_custom_call.1} parent=1 // pred_check_branch
      %15 = sbr.rel (0) target = $region5
    $region4: #{tpu_custom_call.1} parent=1 // pred_region
      %s17 = ssub.s32 256, 256
      %18 = vsyncadd [#allocation3], %s17
      %s19 = sshll.u32 [#allocation2], 4
      %s20 = int_to_ptr.vmem [resolvable:$true] %s19
      %25 = dma.hbm_to_vmem [thread:$0]  %s0, 256, %s20, [#allocation3], 128, 128, 8
    $region5: #{tpu_custom_call.1} parent=1 // pred_fallthru
      _
    // Predicated region
    $region6: #{tpu_custom_call.1} parent=1 // pred_check
      _
    $region7: #{tpu_custom_call.1} parent=1 // pred_check_branch
      %27 = sbr.rel (0) target = $region9
    $region8: #{tpu_custom_call.1} parent=1 // pred_region
      %s29 = ssub.s32 2048, 2048
      %30 = vsyncadd [#allocation6], %s29
      %s31 = sshll.u32 [#allocation5], 4
      %s32 = int_to_ptr.vmem [resolvable:$true] %s31
      %37 = dma.hbm_to_vmem [thread:$0]  %s1, 2048, %s32, [#allocation6], 128, 128, 8
    $region9: #{tpu_custom_call.1} parent=1 // pred_fallthru
      _
    // Predicated region
    $region10: #{tpu_custom_call.1} parent=1 // pred_check
      _
    $region11: #{tpu_custom_call.1} parent=1 // pred_check_branch
      %39 = sbr.rel (0) target = $region13
    $region12: #{tpu_custom_call.1} parent=1 // pred_region
      %s41 = ssub.s32 16, 16
      %42 = vsyncadd [#allocation6], %s41
      %s44 = sshll.u32 [#allocation7], 4
      %s45 = int_to_ptr.vmem [resolvable:$true] %s44
      %47 = dma.hbm_to_vmem [thread:$0]  %s2, 16, %s45, [#allocation6]
    $region13: #{tpu_custom_call.1} parent=1 // pred_fallthru
      _
    // Predicated region
    $region14: #{tpu_custom_call.1} parent=1 // pred_check
      _
    $region15: #{tpu_custom_call.1} parent=1 // pred_check_branch
      %49 = sbr.rel (0) target = $region17
    $region16: #{tpu_custom_call.1} parent=1 // pred_region
      %s51 = ssub.s32 2048, 2048
      %52 = vsyncadd [#allocation9], %s51
      %s53 = sshll.u32 [#allocation8], 4
      %s54 = int_to_ptr.vmem [resolvable:$true] %s53
      %59 = dma.hbm_to_vmem [thread:$0]  %s3, 2048, %s54, [#allocation9], 128, 128, 8
    $region17: #{tpu_custom_call.1} parent=1 // pred_fallthru
      _
    // Predicated region
    $region18: #{tpu_custom_call.1} parent=1 // pred_check
      _
    $region19: #{tpu_custom_call.1} parent=1 // pred_check_branch
      %61 = sbr.rel (0) target = $region21
    $region20: #{tpu_custom_call.1} parent=1 // pred_region
      %s63 = ssub.s32 16, 16
      %64 = vsyncadd [#allocation9], %s63
      %s66 = sshll.u32 [#allocation10], 4
      %s67 = int_to_ptr.vmem [resolvable:$true] %s66
      %69 = dma.hbm_to_vmem [thread:$0]  %s4, 16, %s67, [#allocation9]
    $region21: #{tpu_custom_call.1} parent=1 // pred_fallthru
      _
    // Predicated region
    $region22: #{tpu_custom_call.1} parent=1 // pred_check
      _
    $region23: #{tpu_custom_call.1} parent=1 // pred_check_branch
      %71 = sbr.rel (0) target = $region25
    $region24: #{tpu_custom_call.1} parent=1 // pred_region
      %72 = dma.done [#allocation3], 256
    $region25: #{tpu_custom_call.1} parent=1 // pred_fallthru
      _
    // Predicated region
    $region26: #{tpu_custom_call.1} parent=1 // pred_check
      _
    $region27: #{tpu_custom_call.1} parent=1 // pred_check_branch
      %74 = sbr.rel (0) target = $region29
    $region28: #{tpu_custom_call.1} parent=1 // pred_region
      %75 = dma.done [#allocation6], 2048
    $region29: #{tpu_custom_call.1} parent=1 // pred_fallthru
      _
    // Predicated region
    $region30: #{tpu_custom_call.1} parent=1 // pred_check
      _
    $region31: #{tpu_custom_call.1} parent=1 // pred_check_branch
      %77 = sbr.rel (0) target = $region33
    $region32: #{tpu_custom_call.1} parent=1 // pred_region
      %78 = dma.done [#allocation6], 16
    $region33: #{tpu_custom_call.1} parent=1 // pred_fallthru
      _
    // Predicated region
    $region34: #{tpu_custom_call.1} parent=1 // pred_check
      _
    $region35: #{tpu_custom_call.1} parent=1 // pred_check_branch
      %80 = sbr.rel (0) target = $region37
    $region36: #{tpu_custom_call.1} parent=1 // pred_region
      %81 = dma.done [#allocation9], 2048
    $region37: #{tpu_custom_call.1} parent=1 // pred_fallthru
      _
    // Predicated region
    $region38: #{tpu_custom_call.1} parent=1 // pred_check
      _
    $region39: #{tpu_custom_call.1} parent=1 // pred_check_branch
      %83 = sbr.rel (0) target = $region41
    $region40: #{tpu_custom_call.1} parent=1 // pred_region
      %84 = dma.done [#allocation9], 16
    $region41: #{tpu_custom_call.1} parent=1 // pred_fallthru
      _
    %v85 = vld [vmem:[#allocation2] sm:$0xff]
    %v86 = vld [vmem:[#allocation2 + $0x8] sm:$0xff]
    %v87 = vld [vmem:[#allocation5] sm:$0xff]
    %v88 = vld [vmem:[#allocation5 + $0x8] sm:$0xff]
    %v89 = vld [vmem:[#allocation5 + $0x10] sm:$0xff]
    %v90 = vld [vmem:[#allocation5 + $0x18] sm:$0xff]
    %v91 = vld [vmem:[#allocation5 + $0x20] sm:$0xff]
    %v92 = vld [vmem:[#allocation5 + $0x28] sm:$0xff]
    %v93 = vld [vmem:[#allocation5 + $0x30] sm:$0xff]
    %v94 = vld [vmem:[#allocation5 + $0x38] sm:$0xff]
    %v95 = vld [vmem:[#allocation5 + $0x40] sm:$0xff]
    %v96 = vld [vmem:[#allocation5 + $0x48] sm:$0xff]
    %v97 = vld [vmem:[#allocation5 + $0x50] sm:$0xff]
    %v98 = vld [vmem:[#allocation5 + $0x58] sm:$0xff]
    %v99 = vld [vmem:[#allocation5 + $0x60] sm:$0xff]
    %v100 = vld [vmem:[#allocation5 + $0x68] sm:$0xff]
    %v101 = vld [vmem:[#allocation5 + $0x70] sm:$0xff]
    %v102 = vld [vmem:[#allocation5 + $0x78] sm:$0xff]
    %v103 = vld [vmem:[#allocation7] sm:$0x1]
    %v105 = vlaneseq
    %v106 = vshrl.u32 %v105, 7
    %v107 = vsub.s32 0, %v106
    %v108 = vrot.slane %v103, %v107
    %110 = vmatprep.subr.mxu0 0.0
    %111 = vmatpush1.msra.mxu0 %v87
    %112 = vmatprep.subr.mxu0 0.0
    %113 = vmatpush1.msra.mxu0 %v88
    %114 = vmatprep.subr.mxu0 0.0
    %115 = vmatpush1.msra.mxu0 %v89
    %116 = vmatprep.subr.mxu0 0.0
    %117 = vmatpush1.msra.mxu0 %v90
    %118 = vmatprep.subr.mxu0 0.0
    %119 = vmatpush1.msra.mxu0 %v91
    %120 = vmatprep.subr.mxu0 0.0
    %121 = vmatpush1.msra.mxu0 %v92
    %122 = vmatprep.subr.mxu0 0.0
    %123 = vmatpush1.msra.mxu0 %v93
    %124 = vmatprep.subr.mxu0 0.0
    %125 = vmatpush1.msra.mxu0 %v94
    %126 = vmatprep.subr.mxu0 0.0
    %127 = vmatpush1.msra.mxu0 %v95
    %128 = vmatprep.subr.mxu0 0.0
    %129 = vmatpush1.msra.mxu0 %v96
    %130 = vmatprep.subr.mxu0 0.0
    %131 = vmatpush1.msra.mxu0 %v97
    %132 = vmatprep.subr.mxu0 0.0
    %133 = vmatpush1.msra.mxu0 %v98
    %134 = vmatprep.subr.mxu0 0.0
    %135 = vmatpush1.msra.mxu0 %v99
    %136 = vmatprep.subr.mxu0 0.0
    %137 = vmatpush1.msra.mxu0 %v100
    %138 = vmatprep.subr.mxu0 0.0
    %139 = vmatpush1.msra.mxu0 %v101
    %140 = vmatprep.subr.mxu0 0.0
    %141 = vmatpush1.msra.mxu0 %v102
    %142 = vmatprep.subr.mxu0 0.0
    %143 = vmatpush1.msra.mxu0 0.0
    %144 = vmatprep.subr.mxu0 0.0
    %145 = vmatpush1.msra.mxu0 0.0
    %146 = vmatprep.subr.mxu0 0.0
    %147 = vmatpush1.msra.mxu0 0.0
    %148 = vmatprep.subr.mxu0 0.0
    %149 = vmatpush1.msra.mxu0 0.0
    %150 = vmatprep.subr.mxu0 0.0
    %151 = vmatpush1.msra.mxu0 0.0
    %152 = vmatprep.subr.mxu0 0.0
    %153 = vmatpush1.msra.mxu0 0.0
    %154 = vmatprep.subr.mxu0 0.0
    %155 = vmatpush1.msra.mxu0 0.0
    %156 = vmatprep.subr.mxu0 0.0
    %157 = vmatpush1.msra.mxu0 0.0
    %158 = vmatprep.subr.mxu0 0.0
    %159 = vmatpush1.msra.mxu0 0.0
    %160 = vmatprep.subr.mxu0 0.0
    %161 = vmatpush1.msra.mxu0 0.0
    %162 = vmatprep.subr.mxu0 0.0
    %163 = vmatpush1.msra.mxu0 0.0
    %164 = vmatprep.subr.mxu0 0.0
    %165 = vmatpush1.msra.mxu0 0.0
    %166 = vmatprep.subr.mxu0 0.0
    %167 = vmatpush1.msra.mxu0 0.0
    %168 = vmatprep.subr.mxu0 0.0
    %169 = vmatpush1.msra.mxu0 0.0
    %170 = vmatprep.subr.mxu0 0.0
    %171 = vmatpush1.msra.mxu0 0.0
    %172 = vmatprep.subr.mxu0 0.0
    %173 = vmatpush1.msra.mxu0 0.0
    %174 = vmatprep.mubr.f32.mxu0 0.0
    %175 = vmatmul.mubr.f32.gmra.mrb[0].mxu0 %v85
    %v176 = vpop.f32.mrb[0].mxu0
    %v177 = vadd.f32 %v108, %v176
    %v178 = vpop.f32.mrb[0].mxu0
    %179 = vmatprep.mubr.f32.mxu0 0.0
    %180 = vmatmul.mubr.f32.gmra.mrb[0].mxu0 %v86
    %v181 = vpop.f32.mrb[0].mxu0
    %v182 = vadd.f32 %v108, %v181
    %v183 = vpop.f32.mrb[0].mxu0
    %184 = vdwg.mxu0
    %v185 = vmax.f32 %v177, 0.0
    %v186 = vmax.f32 %v182, 0.0
    %v187 = vld [vmem:[#allocation8] sm:$0xff]
    %v188 = vld [vmem:[#allocation8 + $0x8] sm:$0xff]
    %v189 = vld [vmem:[#allocation8 + $0x10] sm:$0xff]
    %v190 = vld [vmem:[#allocation8 + $0x18] sm:$0xff]
    %v191 = vld [vmem:[#allocation8 + $0x20] sm:$0xff]
    %v192 = vld [vmem:[#allocation8 + $0x28] sm:$0xff]
    %v193 = vld [vmem:[#allocation8 + $0x30] sm:$0xff]
    %v194 = vld [vmem:[#allocation8 + $0x38] sm:$0xff]
    %v195 = vld [vmem:[#allocation8 + $0x40] sm:$0xff]
    %v196 = vld [vmem:[#allocation8 + $0x48] sm:$0xff]
    %v197 = vld [vmem:[#allocation8 + $0x50] sm:$0xff]
    %v198 = vld [vmem:[#allocation8 + $0x58] sm:$0xff]
    %v199 = vld [vmem:[#allocation8 + $0x60] sm:$0xff]
    %v200 = vld [vmem:[#allocation8 + $0x68] sm:$0xff]
    %v201 = vld [vmem:[#allocation8 + $0x70] sm:$0xff]
    %v202 = vld [vmem:[#allocation8 + $0x78] sm:$0xff]
    %v203 = vld [vmem:[#allocation10] sm:$0x1]
    %v205 = vlaneseq
    %v206 = vshrl.u32 %v205, 7
    %v207 = vsub.s32 0, %v206
    %v208 = vrot.slane %v203, %v207
    %210 = vmatprep.subr.mxu0 0.0
    %211 = vmatpush1.msra.mxu0 %v187
    %212 = vmatprep.subr.mxu0 0.0
    %213 = vmatpush1.msra.mxu0 %v188
    %214 = vmatprep.subr.mxu0 0.0
    %215 = vmatpush1.msra.mxu0 %v189
    %216 = vmatprep.subr.mxu0 0.0
    %217 = vmatpush1.msra.mxu0 %v190
    %218 = vmatprep.subr.mxu0 0.0
    %219 = vmatpush1.msra.mxu0 %v191
    %220 = vmatprep.subr.mxu0 0.0
    %221 = vmatpush1.msra.mxu0 %v192
    %222 = vmatprep.subr.mxu0 0.0
    %223 = vmatpush1.msra.mxu0 %v193
    %224 = vmatprep.subr.mxu0 0.0
    %225 = vmatpush1.msra.mxu0 %v194
    %226 = vmatprep.subr.mxu0 0.0
    %227 = vmatpush1.msra.mxu0 %v195
    %228 = vmatprep.subr.mxu0 0.0
    %229 = vmatpush1.msra.mxu0 %v196
    %230 = vmatprep.subr.mxu0 0.0
    %231 = vmatpush1.msra.mxu0 %v197
    %232 = vmatprep.subr.mxu0 0.0
    %233 = vmatpush1.msra.mxu0 %v198
    %234 = vmatprep.subr.mxu0 0.0
    %235 = vmatpush1.msra.mxu0 %v199
    %236 = vmatprep.subr.mxu0 0.0
    %237 = vmatpush1.msra.mxu0 %v200
    %238 = vmatprep.subr.mxu0 0.0
    %239 = vmatpush1.msra.mxu0 %v201
    %240 = vmatprep.subr.mxu0 0.0
    %241 = vmatpush1.msra.mxu0 %v202
    %242 = vmatprep.subr.mxu0 0.0
    %243 = vmatpush1.msra.mxu0 0.0
    %244 = vmatprep.subr.mxu0 0.0
    %245 = vmatpush1.msra.mxu0 0.0
    %246 = vmatprep.subr.mxu0 0.0
    %247 = vmatpush1.msra.mxu0 0.0
    %248 = vmatprep.subr.mxu0 0.0
    %249 = vmatpush1.msra.mxu0 0.0
    %250 = vmatprep.subr.mxu0 0.0
    %251 = vmatpush1.msra.mxu0 0.0
    %252 = vmatprep.subr.mxu0 0.0
    %253 = vmatpush1.msra.mxu0 0.0
    %254 = vmatprep.subr.mxu0 0.0
    %255 = vmatpush1.msra.mxu0 0.0
    %256 = vmatprep.subr.mxu0 0.0
    %257 = vmatpush1.msra.mxu0 0.0
    %258 = vmatprep.subr.mxu0 0.0
    %259 = vmatpush1.msra.mxu0 0.0
    %260 = vmatprep.subr.mxu0 0.0
    %261 = vmatpush1.msra.mxu0 0.0
    %262 = vmatprep.subr.mxu0 0.0
    %263 = vmatpush1.msra.mxu0 0.0
    %264 = vmatprep.subr.mxu0 0.0
    %265 = vmatpush1.msra.mxu0 0.0
    %266 = vmatprep.subr.mxu0 0.0
    %267 = vmatpush1.msra.mxu0 0.0
    %268 = vmatprep.subr.mxu0 0.0
    %269 = vmatpush1.msra.mxu0 0.0
    %270 = vmatprep.subr.mxu0 0.0
    %271 = vmatpush1.msra.mxu0 0.0
    %272 = vmatprep.subr.mxu0 0.0
    %273 = vmatpush1.msra.mxu0 0.0
    %274 = vmatprep.mubr.f32.mxu0 0.0
    %275 = vmatmul.mubr.f32.gmra.mrb[0].mxu0 %v185
    %v276 = vpop.f32.mrb[0].mxu0
    %v277 = vadd.f32 %v208, %v276
    %v278 = vpop.f32.mrb[0].mxu0
    %279 = vmatprep.mubr.f32.mxu0 0.0
    %280 = vmatmul.mubr.f32.gmra.mrb[0].mxu0 %v186
    %v281 = vpop.f32.mrb[0].mxu0
    %v282 = vadd.f32 %v208, %v281
    %v283 = vpop.f32.mrb[0].mxu0
    %284 = vdwg.mxu0
    %v285 = vxor.u32 %v277, 2147483648
    %v286 = vxor.u32 %v282, 2147483648
    %v287 = vmul.f32 %v285, 1.442695
    %v288 = vpow.pop %v287
    %v289 = vmul.f32 %v286, 1.442695
    %v290 = vpow.pop %v289
    %v291 = vadd.f32 %v288, 1.0
    %v292 = vadd.f32 %v290, 1.0
    %v293 = vrcp.pop %v291
    %v294 = vmul.f32 1.0, %v293
    %v295 = vrcp.pop %v292
    %v296 = vmul.f32 1.0, %v295
    %297 = vst [vmem:[#allocation11] sm:$0xff] %v294
    %298 = vst [vmem:[#allocation11 + $0x8] sm:$0xff] %v296
    // Predicated region
    $region42: #{tpu_custom_call.1} parent=1 // pred_check
      _
    $region43: #{tpu_custom_call.1} parent=1 // pred_check_branch
      %300 = sbr.rel (0) target = $region45
    $region44: #{tpu_custom_call.1} parent=1 // pred_region
      %s302 = ssub.s32 256, 256
      %303 = vsyncadd [#allocation4], %s302
      %s304 = sshll.u32 [#allocation11], 4
      %s305 = int_to_ptr.vmem [resolvable:$true] %s304
      %310 = dma.vmem_to_hbm [thread:$0]  %s305, 256, %s5, [#allocation4], 128, 128, 8
    $region45: #{tpu_custom_call.1} parent=1 // pred_fallthru
      _
    // Predicated region
    $region46: #{tpu_custom_call.1} parent=1 // pred_check
      _
    $region47: #{tpu_custom_call.1} parent=1 // pred_check_branch
      %312 = sbr.rel (0) target = $region49
    $region48: #{tpu_custom_call.1} parent=1 // pred_region
      %313 = dma.done [#allocation4], 256
    $region49: #{tpu_custom_call.1} parent=1 // pred_fallthru
      _
    %314 = vsyncpa [#allocation3], 1
    %315 = vsyncpa [#allocation6], 1
    %316 = vsyncpa [#allocation9], 1
    %317 = vsyncpa [#allocation4], 1

</llo_original>
